<compile_context>
chip_gen: v7x
topology: tpu7x:2x2x1
jax: 0.10.0
libtpu: 0.0.40
codegen_flags: <defaults>
</compile_context>

<pallas_src>
import functools

import jax
import jax.numpy as jnp
from jax.experimental import pallas as pl
from jax.experimental.pallas import tpu as pltpu

_SUBLANES = 8
_LANES = 128


def _xent_kernel(targets_ref, logits_ref, partial_ref, *, batch_size, block_b):
    """One batch tile: partial sum of per-example cross-entropy losses."""
    i = pl.program_id(0)

    x = logits_ref[...].astype(jnp.float32)            # (TB, C) f32 (bf16 cast hides under DMA)
    t = targets_ref[...]                                # (TB, 1) int32

    # Numerically stable log-softmax pieces; exp computed once and reused.
    m = jnp.max(x, axis=-1, keepdims=True)              # (TB, 1)
    e = jnp.exp(x - m)                                   # (TB, C), EUP slot
    lse = m + jnp.log(jnp.sum(e, axis=-1, keepdims=True))

    # Target-class logit via one-hot mask (no dynamic gather on TPU).
    col = jax.lax.broadcasted_iota(jnp.int32, x.shape, dimension=1)
    tgt_logit = jnp.sum(jnp.where(col == t, x, 0.0), axis=-1, keepdims=True)

    per_example = lse - tgt_logit                        # (TB, 1) = -log p[target]

    # Mask padded rows of the (possibly partial) last block.
    row = jax.lax.broadcasted_iota(jnp.int32, per_example.shape, dimension=0) + i * block_b
    per_example = jnp.where(row < batch_size, per_example, 0.0)

    # f32 partial sum for this block, broadcast into a lane-dense output tile.
    block_sum = jnp.sum(per_example, axis=0, keepdims=True)           # (1, 1)
    partial_ref[...] = jnp.broadcast_to(block_sum.reshape(1, 1, 1), partial_ref.shape)


def _choose_block_b(batch: int, n_classes: int, itemsize: int) -> int:
    """Batch tile: ~4 MiB logits block, aligned to the dtype's sublane packing."""
    row_align = _SUBLANES * max(1, 4 // itemsize)   # 8 (f32) / 16 (bf16) / 32 (int8)
    if batch <= row_align:
        return batch                                 # full-dim block is always legal
    target_block_bytes = 4 * 1024 * 1024             # x2 (double buffer) stays well
    tb = target_block_bytes // max(n_classes * itemsize, 1)   # under 64 MiB VMEM (v7x)
    tb = max(row_align, min(int(tb), 1024))
    tb = (tb // row_align) * row_align
    tb = min(tb, (batch // row_align) * row_align)
    return max(tb, row_align)


def classification_loss(targets: jax.Array, logits: jax.Array, *, block_b: int | None = None) -> jax.Array:
    """ClassificationLoss.forward(targets, *outputs) with a cross-entropy `_loss`.

    targets: (B,) integer class labels; logits: (B, C) f32/bf16. Returns scalar f32.
    """
    B, C = logits.shape
    targets_2d = targets.astype(jnp.int32).reshape(B, 1)

    itemsize = jnp.dtype(logits.dtype).itemsize
    tb = block_b if block_b is not None else _choose_block_b(B, C, itemsize)
    num_blocks = pl.cdiv(B, tb)

    kernel = functools.partial(_xent_kernel, batch_size=B, block_b=tb)

    partials = pl.pallas_call(
        kernel,
        out_shape=jax.ShapeDtypeStruct((num_blocks, _SUBLANES, _LANES), jnp.float32),
        grid_spec=pl.GridSpec(
            grid=(num_blocks,),
            in_specs=[
                pl.BlockSpec((tb, 1), lambda i: (i, 0)),   # targets block (VMEM)
                pl.BlockSpec((tb, C), lambda i: (i, 0)),   # logits block (VMEM)
            ],
            out_specs=pl.BlockSpec((1, _SUBLANES, _LANES), lambda i: (i, 0, 0)),
        ),
        compiler_params=pltpu.CompilerParams(
            dimension_semantics=("parallel",),   # batch blocks are independent (v7x 2 TCs)
        ),
    )(targets_2d, logits)

    # Final mean in plain JAX (f32 accumulation over per-block partial sums).
    return jnp.sum(partials[:, 0, 0]) / jnp.float32(B)


# TODO(synk): `_loss` / `_get_correct` are abstract in the PyTorch module; cross-entropy
#             (no ignore_index) was chosen as the canonical concrete `_loss`.
# TODO(synk): for LLM-scale vocab (C >= ~32k) add a class-axis grid dimension with an
#             online logsumexp (flash-softmax style running m/l scratch).


def _reference_loss(targets, logits):
    logp = jax.nn.log_softmax(logits.astype(jnp.float32), axis=-1)
    picked = jnp.take_along_axis(logp, targets[:, None].astype(jnp.int32), axis=-1)
    return -jnp.mean(picked)


if __name__ == "__main__":
    key = jax.random.PRNGKey(0)
    k1, k2, k3, k4 = jax.random.split(key, 4)

    # Case 1: tiny single-block classification head, f32 logits.
    B1, C1 = 8, 32
    logits1 = jax.random.normal(k1, (B1, C1), dtype=jnp.float32)
    targets1 = jax.random.randint(k2, (B1,), 0, C1, dtype=jnp.int32)
    loss1 = classification_loss(targets1, logits1)
    jax.block_until_ready(loss1)
    ref1 = _reference_loss(targets1, logits1)
    assert jnp.allclose(loss1, ref1, atol=1e-5, rtol=1e-5), (loss1, ref1)

    # Case 2: multi-block batch grid with a padded last block, bf16 logits.
    B2, C2 = 20, 128
    logits2 = jax.random.normal(k3, (B2, C2), dtype=jnp.float32).astype(jnp.bfloat16)
    targets2 = jax.random.randint(k4, (B2,), 0, C2, dtype=jnp.int32)
    loss2 = classification_loss(targets2, logits2)   # heuristic picks TB=16 -> 2 blocks, masked tail
    jax.block_until_ready(loss2)
    ref2 = _reference_loss(targets2, logits2)
    assert jnp.allclose(loss2, ref2, atol=1e-4, rtol=1e-4), (loss2, ref2)

    print("KERNEL_OK")
</pallas_src>

<mosaic_0001>
module attributes {stable_mosaic.version = 11 : i64} {
  func.func @_xent_kernel(%arg0: i32, %arg1: memref<8x1xi32, #tpu.memory_space<vmem>>, %arg2: memref<8x32xf32, #tpu.memory_space<vmem>>, %arg3: memref<1x8x128xf32, #tpu.memory_space<vmem>>) attributes {dimension_semantics = [#tpu.dimension_semantics<parallel>], iteration_bounds = array<i64: 1>, scalar_prefetch = 0 : i64, scratch_operands = 0 : i64, tpu.core_type = #tpu.core_type<tc>, window_params = [{transform_indices = @transform_0, window_bounds = array<i64: 8, 1>}, {transform_indices = @transform_1, window_bounds = array<i64: 8, 32>}, {transform_indices = @transform_2, window_bounds = array<i64: 1, 8, 128>}]} {
    %c0 = arith.constant 0 : index
    %c0_0 = arith.constant 0 : index
    %0 = vector.load %arg2[%c0, %c0_0] : memref<8x32xf32, #tpu.memory_space<vmem>>, vector<8x32xf32>
    %c0_1 = arith.constant 0 : index
    %c0_2 = arith.constant 0 : index
    %1 = vector.load %arg1[%c0_1, %c0_2] : memref<8x1xi32, #tpu.memory_space<vmem>>, vector<8x1xi32>
    %cst = arith.constant dense<0xFF800000> : vector<8xf32>
    %2 = vector.multi_reduction <maximumf>, %0, %cst [1] : vector<8x32xf32> to vector<8xf32>
    %3 = vector.shape_cast %2 : vector<8xf32> to vector<8x1xf32>
    %4 = vector.broadcast %3 : vector<8x1xf32> to vector<8x32xf32>
    %5 = arith.subf %0, %4 : vector<8x32xf32>
    %6 = math.exp %5 : vector<8x32xf32>
    %cst_3 = arith.constant dense<0.000000e+00> : vector<8xf32>
    %7 = vector.multi_reduction <add>, %6, %cst_3 [1] : vector<8x32xf32> to vector<8xf32>
    %8 = vector.shape_cast %7 : vector<8xf32> to vector<8x1xf32>
    %9 = math.log %8 : vector<8x1xf32>
    %10 = arith.addf %3, %9 : vector<8x1xf32>
    %11 = tpu.iota {dimensions = array<i32: 1>} : vector<8x32xi32>
    %12 = vector.broadcast %1 : vector<8x1xi32> to vector<8x32xi32>
    %13 = arith.cmpi eq, %11, %12 : vector<8x32xi32>
    %cst_4 = arith.constant 0.000000e+00 : f32
    %14 = vector.broadcast %cst_4 : f32 to vector<8x32xf32>
    %15 = arith.select %13, %0, %14 : vector<8x32xi1>, vector<8x32xf32>
    %cst_5 = arith.constant dense<0.000000e+00> : vector<8xf32>
    %16 = vector.multi_reduction <add>, %15, %cst_5 [1] : vector<8x32xf32> to vector<8xf32>
    %17 = vector.shape_cast %16 : vector<8xf32> to vector<8x1xf32>
    %18 = arith.subf %10, %17 : vector<8x1xf32>
    %19 = tpu.iota {dimensions = array<i32: 0>} : vector<8x1xi32>
    %c8_i32 = arith.constant 8 : i32
    %20 = arith.muli %arg0, %c8_i32 : i32
    %21 = vector.broadcast %20 : i32 to vector<8x1xi32>
    %22 = arith.addi %19, %21 : vector<8x1xi32>
    %c8_i32_6 = arith.constant 8 : i32
    %23 = vector.broadcast %c8_i32_6 : i32 to vector<8x1xi32>
    %24 = arith.cmpi slt, %22, %23 : vector<8x1xi32>
    %cst_7 = arith.constant 0.000000e+00 : f32
    %25 = vector.broadcast %cst_7 : f32 to vector<8x1xf32>
    %26 = arith.select %24, %18, %25 : vector<8x1xi1>, vector<8x1xf32>
    %cst_8 = arith.constant dense<0.000000e+00> : vector<1xf32>
    %27 = vector.multi_reduction <add>, %26, %cst_8 [0] : vector<8x1xf32> to vector<1xf32>
    %28 = vector.shape_cast %27 : vector<1xf32> to vector<1x1xf32>
    %29 = vector.shape_cast %28 : vector<1x1xf32> to vector<1x1x1xf32>
    %30 = vector.shape_cast %29 : vector<1x1x1xf32> to vector<1x1x1xf32>
    %31 = vector.broadcast %30 : vector<1x1x1xf32> to vector<1x8x128xf32>
    %c0_9 = arith.constant 0 : index
    %c0_10 = arith.constant 0 : index
    %c0_11 = arith.constant 0 : index
    %32 = vector.load %arg3[%c0_9, %c0_10, %c0_11] : memref<1x8x128xf32, #tpu.memory_space<vmem>>, vector<1x8x128xf32>
    tpu.vector_store %arg3[%c0_9, %c0_10, %c0_11], %31 {strides = array<i32>} : memref<1x8x128xf32, #tpu.memory_space<vmem>>, vector<1x8x128xf32>,
    return
  }
  func.func @transform_0(%arg0: i32) -> (i32, i32) {
    %c0_i32 = arith.constant 0 : i32
    %c0_i32_0 = arith.constant 0 : i32
    return %arg0, %c0_i32 : i32, i32
  }
  func.func @transform_1(%arg0: i32) -> (i32, i32) {
    %c0_i32 = arith.constant 0 : i32
    %c0_i32_0 = arith.constant 0 : i32
    return %arg0, %c0_i32 : i32, i32
  }
  func.func @transform_2(%arg0: i32) -> (i32, i32, i32) {
    %c0_i32 = arith.constant 0 : i32
    %c0_i32_0 = arith.constant 0 : i32
    %c0_i32_1 = arith.constant 0 : i32
    return %arg0, %c0_i32, %c0_i32_0 : i32, i32, i32
  }
}

</mosaic_0001>

<llo_original>
// kernel: tpu_custom_call.1
$region0: #{tpu_custom_call.1}
  #allocation0 [shape = 'u32[]', space=smem, size = 0x4, offset = 0x4, fixed_abs, tag = 'smem constant byte address 0x4 - core index']
  #allocation1 [shape = 'u32[144,128]{1,0:T(1,128)}', space=vmem, size = 0x12000, scoped, tag = 'internal scratch']
  %s0 = inlined_call_operand.vmem [shape: s32[8,1], index: 0, kind: input, shape index: {}]
  %s1 = inlined_call_operand.vmem [shape: f32[8,32], index: 1, kind: input, shape index: {}]
  %s2 = inlined_call_operand.hbm [shape: f32[1,8,128], index: 2, kind: output, shape index: {}]
  %s3 = sld [smem:[#allocation0]]
  $region18: #{tpu_custom_call.1} parent=0
    _
  %s5 = ssub.s32 1, %s3
  %s6 = scalar_select 0, %s5, %s3
  $region1: #{tpu_custom_call.1} parent=0
    #allocation2 [shape = 'u8[4096]{0}', space=vmem, size = 0x1000, scoped, tag = 'output window, operand 0, single buffered']
    #allocation3 [shape = 's32[1]{0}', space=sflag, size = 0x4, scoped, tag = 'scoped memory for tpu_custom_call.1']
    %7 = vsyncpa [#allocation3], 0
    // Predicated region
    $region2: #{tpu_custom_call.1} parent=1 // pred_check
      _
    $region3: #{tpu_custom_call.1} parent=1 // pred_check_branch
      %9 = sbr.rel (0) target = $region5
    $region4: #{tpu_custom_call.1} parent=1 // pred_region
      _
    $region5: #{tpu_custom_call.1} parent=1 // pred_fallthru
      _
    // Predicated region
    $region6: #{tpu_custom_call.1} parent=1 // pred_check
      _
    $region7: #{tpu_custom_call.1} parent=1 // pred_check_branch
      %11 = sbr.rel (0) target = $region9
    $region8: #{tpu_custom_call.1} parent=1 // pred_region
      _
    $region9: #{tpu_custom_call.1} parent=1 // pred_fallthru
      _
    %v12 = vld [vmem:[%s1] sm:$0xff]
    %v13 = vld [vmem:[%s0] sm:$0xff]
    %vm14 = vcmask 261120
    %v15 = vsel %vm14, %v12, -inf
    %16 = vmax.xlane.f32.xlu0 %v15
    %v17 = vpop.xlane.xlu0 %16
    %v18 = vsub.f32 %v12, %v17
    %v19 = vmul.f32 %v18, 1.442695
    %v20 = vpow.pop %v19
    %v21 = vsel %vm14, %v20, 0.0
    %22 = vadd.xlane.f32.xlu0 %v21
    %v23 = vpop.xlane.xlu0 %22
    %v24 = vlog2.pop %v23
    %v25 = vmul.f32 %v24, 0.6931472
    %v26 = vadd.f32 %v17, %v25
    %v27 = vlaneseq
    %v28 = vand.u32 %v27, 127
    %29 = vset.pattern.permute.xlu0 0
    %30 = vperm.xlu0 %29, %v13
    %v31 = vpop.permute.xlu0 %30
    %vm32 = vcmp.eq.s32.totalorder %v28, %v31
    %v33 = vsel %vm32, %v12, 0.0
    %v34 = vsel %vm14, %v33, 0.0
    %35 = vadd.xlane.f32.xlu0 %v34
    %v36 = vpop.xlane.xlu0 %35
    %v37 = vsub.f32 %v26, %v36
    %v38 = vlaneseq
    %v39 = vshrl.u32 %v38, 7
    %s40 = smul.u32 0, 8
    %v41 = vstv %s40
    %v42 = vadd.s32 %v39, %v41
    %vm43 = vcmp.lt.s32.totalorder %v42, 8
    %v44 = vsel %vm43, %v37, 0.0
    %v45 = vrot.slane %v44, 4
    %v46 = vadd.f32 %v44, %v45
    %v47 = vrot.slane %v46, 2
    %v48 = vadd.f32 %v46, %v47
    %v49 = vrot.slane %v48, 1
    %v50 = vadd.f32 %v48, %v49
    %51 = vst [vmem:[#allocation2] sm:$0xff] %v50
    // Predicated region
    $region10: #{tpu_custom_call.1} parent=1 // pred_check
      _
    $region11: #{tpu_custom_call.1} parent=1 // pred_check_branch
      %53 = sbr.rel (0) target = $region13
    $region12: #{tpu_custom_call.1} parent=1 // pred_region
      %s55 = ssub.s32 128, 128
      %56 = vsyncadd [#allocation3], %s55
      %s58 = sshll.u32 [#allocation2], 4
      %s59 = int_to_ptr.vmem [resolvable:$true] %s58
      %61 = dma.vmem_to_hbm [thread:$0]  %s59, 128, %s2, [#allocation3]
    $region13: #{tpu_custom_call.1} parent=1 // pred_fallthru
      _
    // Predicated region
    $region14: #{tpu_custom_call.1} parent=1 // pred_check
      _
    $region15: #{tpu_custom_call.1} parent=1 // pred_check_branch
      %63 = sbr.rel (0) target = $region17
    $region16: #{tpu_custom_call.1} parent=1 // pred_region
      %64 = dma.done [#allocation3], 128
    $region17: #{tpu_custom_call.1} parent=1 // pred_fallthru
      _
    %65 = vsyncpa [#allocation3], 1

</llo_original>
